<compile_context>
chip_gen: v7x
topology: tpu7x:2x2x1
jax: 0.10.0
libtpu: 0.0.40
codegen_flags: <defaults>
</compile_context>

<pallas_src>
import functools
import math

import jax
import jax.numpy as jnp
import numpy as np
from jax.experimental import pallas as pl
from jax.experimental.pallas import tpu as pltpu


def build_pe_table(d_model: int, max_len: int = 80) -> jnp.ndarray:
    """Exact reproduction of the PyTorch double loop (float32). d_model must be even."""
    pe = np.zeros((max_len, d_model), dtype=np.float32)
    for pos in range(max_len):
        for i in range(0, d_model, 2):
            pe[pos, i] = math.sin(pos / math.pow(10000, 2 * i / d_model))
            pe[pos, i + 1] = math.cos(pos / math.pow(10000, 2 * (i + 1) / d_model))
    return jnp.asarray(pe)  # (max_len, d_model)


def _pos_enc_kernel(x_ref, pe_ref, o_ref, *, scale):
    # x_ref / o_ref: (TB, TN) lane-dense tiles of the flattened (B, S*D) view.
    # pe_ref:        (1, TN)  positional-encoding slab (f32), broadcast over rows.
    x = x_ref[...].astype(jnp.float32)
    pe = pe_ref[...].astype(jnp.float32)
    o_ref[...] = (x * scale + pe).astype(o_ref.dtype)


def _hw_budgets():
    """Generation-aware per-tile byte budget and scoped-VMEM ceiling."""
    vmem_cap = 128 << 20
    try:
        info = pltpu.get_tpu_info()
        vmem_cap = int(getattr(info, "vmem_capacity_bytes", vmem_cap))
    except Exception:
        pass
    if vmem_cap <= (64 << 20):
        # v7x: 64 MiB physical VMEM, 3.2 TB/s HBM -> bigger tiles to amortize
        # the ~0.35 us per-step overhead, but keep scoped VMEM well under 64 MiB.
        return 8 << 20, 44 << 20
    # v5e / v6e: 128 MiB physical VMEM; 4 MiB tiles already hit ~85% of roofline.
    return 4 << 20, 64 << 20


def _select_tiles(B, N, itemsize, target_tile_bytes):
    """Pick (TB, TN) so that TB*TN*itemsize <= target (barring the full-dim
    escape hatch), TN % 128 == 0 dividing N, TB a multiple of the sublane pack."""
    sublane_pack = {4: 8, 2: 16, 1: 32}.get(itemsize, 8)
    min_rows = min(B, sublane_pack)

    # Lane tile first: only split N when even a minimal-row full-width tile
    # would exceed the budget AND N splits cleanly into 128-lane chunks.
    if N % 128 == 0 and min_rows * N * itemsize > target_tile_bytes:
        TN = (target_tile_bytes // (min_rows * itemsize) // 128) * 128
        TN = max(128, min(TN, N))
        while TN > 128 and N % TN != 0:   # keep every block unmasked
            TN -= 128
    else:
        TN = N  # full-dim escape hatch of the (8,128) rule

    # Row tile from what remains of the budget.
    rows_budget = max(1, target_tile_bytes // (TN * itemsize))
    if rows_budget >= B:
        TB = B
    else:
        TB = max(sublane_pack, (rows_budget // sublane_pack) * sublane_pack)
        TB = min(TB, B)

    # Guarantee >= 2 grid steps (v7x has 2 TensorCores; a 1-step grid also has
    # no pipelining).  Prefer splitting the batch axis (keeps lane width max).
    if pl.cdiv(B, TB) * pl.cdiv(N, TN) == 1:
        if TB % (2 * sublane_pack) == 0:
            TB //= 2
        elif TN % 256 == 0:
            TN //= 2

    return TB, TN, sublane_pack


def position_encoder(x: jnp.ndarray, pe_table: jnp.ndarray) -> jnp.ndarray:
    """x: (B, S, D);  pe_table: (max_len, D) float32.  Returns x*sqrt(D) + pe[:S]."""
    B, S, D = x.shape
    N = S * D
    scale = math.sqrt(D)
    itemsize = jnp.dtype(x.dtype).itemsize

    # Lane-dense 2-D views (cheap wrapper-side reshapes, no data movement).
    x2 = x.reshape(B, N)
    pe2 = pe_table[:S, :].astype(jnp.float32).reshape(1, N)

    target_tile_bytes, vmem_ceiling = _hw_budgets()
    TB, TN, _ = _select_tiles(B, N, itemsize, target_tile_bytes)

    # Grid: lane tiles OUTER, batch tiles INNER.  pe's block index (0, j) is
    # then constant across the inner sweep -> Pallas skips redundant pe DMAs.
    grid = (pl.cdiv(N, TN), pl.cdiv(B, TB))

    # Explicit VMEM budget: double-buffered x tile + out tile + pe tile.
    x_tile_bytes = TB * TN * itemsize
    pe_tile_bytes = TN * 4
    needed = 4 * x_tile_bytes + 2 * pe_tile_bytes
    vmem_limit = int(min(max(needed + (2 << 20), 8 << 20), vmem_ceiling))

    kernel = functools.partial(_pos_enc_kernel, scale=scale)

    out2 = pl.pallas_call(
        kernel,
        out_shape=jax.ShapeDtypeStruct((B, N), x.dtype),
        grid_spec=pltpu.PrefetchScalarGridSpec(
            num_scalar_prefetch=0,
            grid=grid,
            in_specs=[
                pl.BlockSpec((TB, TN), lambda j, i: (i, j)),   # x
                pl.BlockSpec((1, TN), lambda j, i: (0, j)),    # pe (revisited)
            ],
            out_specs=pl.BlockSpec((TB, TN), lambda j, i: (i, j)),
        ),
        compiler_params=pltpu.CompilerParams(
            dimension_semantics=("parallel", "parallel"),
            vmem_limit_bytes=vmem_limit,
        ),
    )(x2, pe2)

    return out2.reshape(B, S, D)


if __name__ == "__main__":
    # Small shapes consistent with the module: batch=2, seq=8, d_model=32.
    B, S, D = 2, 8, 32
    MAX_LEN = 80

    key = jax.random.PRNGKey(0)
    x = jax.random.normal(key, (B, S, D), dtype=jnp.float32)

    pe_table = build_pe_table(D, MAX_LEN)

    out = position_encoder(x, pe_table)
    out = jax.block_until_ready(out)

    # Reference check in plain JAX (same math as the PyTorch module).
    ref = x * math.sqrt(D) + pe_table[:S, :][None, :, :]
    np.testing.assert_allclose(np.asarray(out), np.asarray(ref), rtol=1e-6, atol=1e-6)

    print("KERNEL_OK")
</pallas_src>

<mosaic_0001>
module attributes {stable_mosaic.version = 11 : i64} {
  func.func @_pos_enc_kernel(%arg0: i32, %arg1: i32, %arg2: memref<2x128xf32, #tpu.memory_space<vmem>>, %arg3: memref<1x128xf32, #tpu.memory_space<vmem>>, %arg4: memref<2x128xf32, #tpu.memory_space<vmem>>) attributes {dimension_semantics = [#tpu.dimension_semantics<parallel>, #tpu.dimension_semantics<parallel>], iteration_bounds = array<i64: 2, 1>, scalar_prefetch = 0 : i64, scratch_operands = 0 : i64, tpu.core_type = #tpu.core_type<tc>, window_params = [{transform_indices = @transform_0, window_bounds = array<i64: 2, 128>}, {transform_indices = @transform_1, window_bounds = array<i64: 1, 128>}, {transform_indices = @transform_2, window_bounds = array<i64: 2, 128>}]} {
    %c0 = arith.constant 0 : index
    %c0_0 = arith.constant 0 : index
    %0 = vector.load %arg2[%c0, %c0_0] : memref<2x128xf32, #tpu.memory_space<vmem>>, vector<2x128xf32>
    %c0_1 = arith.constant 0 : index
    %c0_2 = arith.constant 0 : index
    %1 = vector.load %arg3[%c0_1, %c0_2] : memref<1x128xf32, #tpu.memory_space<vmem>>, vector<1x128xf32>
    %cst = arith.constant 5.65685415 : f32
    %2 = vector.broadcast %cst : f32 to vector<2x128xf32>
    %3 = arith.mulf %0, %2 : vector<2x128xf32>
    %4 = vector.broadcast %1 : vector<1x128xf32> to vector<2x128xf32>
    %5 = arith.addf %3, %4 : vector<2x128xf32>
    %c0_3 = arith.constant 0 : index
    %c0_4 = arith.constant 0 : index
    %6 = vector.load %arg4[%c0_3, %c0_4] : memref<2x128xf32, #tpu.memory_space<vmem>>, vector<2x128xf32>
    tpu.vector_store %arg4[%c0_3, %c0_4], %5 {strides = array<i32>} : memref<2x128xf32, #tpu.memory_space<vmem>>, vector<2x128xf32>,
    return
  }
  func.func @transform_0(%arg0: i32, %arg1: i32) -> (i32, i32) {
    %c0_i32 = arith.constant 0 : i32
    return %arg1, %arg0 : i32, i32
  }
  func.func @transform_1(%arg0: i32, %arg1: i32) -> (i32, i32) {
    %c0_i32 = arith.constant 0 : i32
    %c0_i32_0 = arith.constant 0 : i32
    return %c0_i32, %arg0 : i32, i32
  }
  func.func @transform_2(%arg0: i32, %arg1: i32) -> (i32, i32) {
    %c0_i32 = arith.constant 0 : i32
    return %arg1, %arg0 : i32, i32
  }
}

</mosaic_0001>

<llo_original>
// kernel: tpu_custom_call.1
$region0: #{tpu_custom_call.1}
  #allocation0 [shape = 'u32[]', space=smem, size = 0x4, offset = 0x4, fixed_abs, tag = 'smem constant byte address 0x4 - core index']
  #allocation1 [shape = 'u32[144,128]{1,0:T(1,128)}', space=vmem, size = 0x12000, scoped, tag = 'internal scratch']
  %s0 = inlined_call_operand.hbm [shape: f32[2,256], index: 0, kind: input, shape index: {}]
  %s1 = inlined_call_operand.vmem [shape: f32[1,256], index: 1, kind: input, shape index: {}]
  %s2 = inlined_call_operand.hbm [shape: f32[2,256], index: 2, kind: output, shape index: {}]
  %s3 = sld [smem:[#allocation0]]
  $region45: #{tpu_custom_call.1} parent=0
    _
  %s5 = ssub.s32 1, %s3
  %s6 = scalar_select 0, %s5, %s3
  $region1: #{tpu_custom_call.1} parent=0
    #allocation2 [shape = 'u8[2048]{0}', space=vmem, size = 0x800, scoped, tag = 'input window, operand 0']
    #allocation3 [shape = 's32[2]{0}', space=sflag, size = 0x8, scoped, tag = 'scoped memory for tpu_custom_call.1']
    #allocation4 [shape = 's32[2]{0}', space=sflag, size = 0x8, scoped, tag = 'scoped memory for tpu_custom_call.1']
    #allocation5 [shape = 'u8[2048]{0}', space=vmem, size = 0x800, scoped, tag = 'output window, operand 0']
    %7 = vsyncpa [#allocation3], 0
    %s8 = scalar_lea.sflag [#allocation3], 1
    %9 = vsyncpa %s8, 0
    %10 = vsyncpa [#allocation4], 0
    %s11 = scalar_lea.sflag [#allocation4], 1
    %12 = vsyncpa %s11, 0
    loop: start=0, step=1, limit=4
    $region2: #{tpu_custom_call.1} parent=1 // loop_pre_header
      _
    $region3: #{tpu_custom_call.1} parent=1 // loop_header
      %s14 = sphi 0, %s18
      %p15 = scmp.ge.s32.totalorder %s14, 4
      %s21 = sphi 0, %s33
      %s22 = sphi 0, %s29
      %s23 = sphi 0, %s21
      %s24 = sphi 0, %s22
      %s25 = sphi 0, %s23
      %s26 = sphi 0, %s24
      %s38 = sphi 0, %s40
      %s41 = sphi 0, %s38
      %s42 = sphi 0, %s41
      %s58 = sphi 0, %s42
      %s64 = sphi 0, %s66
      %s67 = sphi 0, %s64
      %s68 = sphi 0, %s67
      %s84 = sphi 0, %s68
      %s92 = sphi 0, %s94
      %s95 = sphi 0, %s92
      %s96 = sphi 0, %s95
      %s112 = sphi 0, %s96
    $region4: #{tpu_custom_call.1} parent=1 // loop_header_branch
      %17 = sbr.rel (%p15) target = $region8
    $region5: #{tpu_custom_call.1} parent=1 // loop_body
      %s19 = ssub.s32 %s14, 1
      %s20 = ssub.s32 %s14, 2
      %s27 = sadd.s32 1, %s22
      %p28 = scmp.ge.s32.totalorder %s27, 1
      %s29 = scalar_select %p28, 0, %s27
      %s30 = sadd.s32 1, %s21
      %s31 = scalar_select %p28, %s30, %s21
      %p32 = scmp.ge.s32.totalorder %s31, 2
      %s33 = scalar_select %p32, 0, %s31
      %s34 = ssub.s32 %s22, %s29
      %s35 = ssub.s32 %s21, %s33
      %s36 = sor.u32 %s34, %s35
      %p37 = scmp.eq.s32.totalorder %s36, 0
      %s39 = sadd.s32 %s38, 1
      %s40 = scalar_select %p37, %s38, %s39
      %p43 = pneg %p37
      %p44 = scmp.eq.s32.totalorder %s14, 1
      %p45 = por %p43, %p44
      %p46 = scmp.ne.s32.totalorder %s38, %s41
      %p47 = scmp.eq.s32.totalorder %s14, 0
      %p48 = por %p46, %p47
      %p49 = scmp.ne.s32.totalorder %s38, %s41
      %p50 = scmp.eq.s32.totalorder %s19, 1
      %p51 = por %p49, %p50
      %p52 = scmp.ne.s32.totalorder %s41, %s42
      %p53 = scmp.eq.s32.totalorder %s19, 0
      %p54 = por %p52, %p53
      %p55 = scmp.ne.s32.totalorder %s41, %s42
      %p56 = scmp.eq.s32.totalorder %s20, 1
      %p57 = por %p55, %p56
      %p59 = scmp.ne.s32.totalorder %s42, %s58
      %p60 = scmp.eq.s32.totalorder %s20, 0
      %p61 = por %p59, %p60
      %s62 = ssub.s32 %s21, %s33
      %p63 = scmp.eq.s32.totalorder %s62, 0
      %s65 = sadd.s32 %s64, 1
      %s66 = scalar_select %p63, %s64, %s65
      %p69 = pneg %p63
      %p70 = scmp.eq.s32.totalorder %s14, 1
      %p71 = por %p69, %p70
      %p72 = scmp.ne.s32.totalorder %s64, %s67
      %p73 = scmp.eq.s32.totalorder %s14, 0
      %p74 = por %p72, %p73
      %p75 = scmp.ne.s32.totalorder %s64, %s67
      %p76 = scmp.eq.s32.totalorder %s19, 1
      %p77 = por %p75, %p76
      %p78 = scmp.ne.s32.totalorder %s67, %s68
      %p79 = scmp.eq.s32.totalorder %s19, 0
      %p80 = por %p78, %p79
      %p81 = scmp.ne.s32.totalorder %s67, %s68
      %p82 = scmp.eq.s32.totalorder %s20, 1
      %p83 = por %p81, %p82
      %p85 = scmp.ne.s32.totalorder %s68, %s84
      %p86 = scmp.eq.s32.totalorder %s20, 0
      %p87 = por %p85, %p86
      %s88 = ssub.s32 %s22, %s29
      %s89 = ssub.s32 %s21, %s33
      %s90 = sor.u32 %s88, %s89
      %p91 = scmp.eq.s32.totalorder %s90, 0
      %s93 = sadd.s32 %s92, 1
      %s94 = scalar_select %p91, %s92, %s93
      %p97 = pneg %p91
      %p98 = scmp.eq.s32.totalorder %s14, 1
      %p99 = por %p97, %p98
      %p100 = scmp.ne.s32.totalorder %s92, %s95
      %p101 = scmp.eq.s32.totalorder %s14, 0
      %p102 = por %p100, %p101
      %p103 = scmp.ne.s32.totalorder %s92, %s95
      %p104 = scmp.eq.s32.totalorder %s19, 1
      %p105 = por %p103, %p104
      %p106 = scmp.ne.s32.totalorder %s95, %s96
      %p107 = scmp.eq.s32.totalorder %s19, 0
      %p108 = por %p106, %p107
      %p109 = scmp.ne.s32.totalorder %s95, %s96
      %p110 = scmp.eq.s32.totalorder %s20, 1
      %p111 = por %p109, %p110
      %p113 = scmp.ne.s32.totalorder %s96, %s112
      %p114 = scmp.eq.s32.totalorder %s20, 0
      %p115 = por %p113, %p114
      %p116 = scmp.le.s32.totalorder 1, %s14
      %p117 = scmp.lt.s32.totalorder %s14, 3
      %p118 = pnand %p116, %p117
      %p119 = pneg %p118
      // Predicated region
      $region9: #{tpu_custom_call.1} parent=5 // pred_check
        _
      $region10: #{tpu_custom_call.1} parent=5 // pred_check_branch
        %121 = sbr.rel (%p118) target = $region12
      $region11: #{tpu_custom_call.1} parent=5 // pred_region
        %s122 = ssub.s32 %s14, 1
      $region12: #{tpu_custom_call.1} parent=5 // pred_fallthru
        _
      %p123 = scmp.lt.s32.totalorder %s14, 2
      // Predicated region
      $region13: #{tpu_custom_call.1} parent=5 // pred_check
        %p124 = pneg %p123
      $region14: #{tpu_custom_call.1} parent=5 // pred_check_branch
        %126 = sbr.rel (%p124) target = $region16
      $region15: #{tpu_custom_call.1} parent=5 // pred_region
        // Predicated region
        $region17: #{tpu_custom_call.1} parent=15 // pred_check
          %p127 = pneg %p48
        $region18: #{tpu_custom_call.1} parent=15 // pred_check_branch
          %129 = sbr.rel (%p127) target = $region20
        $region19: #{tpu_custom_call.1} parent=15 // pred_region
          %s130 = sand.u32 %s38, 1
          %s131 = scalar_lea.sflag [#allocation3], %s130
          %s132 = sand.u32 %s38, 1
          %s133 = smul.addr %s132, 2
          %s134 = scalar_lea.vmem [#allocation2], %s133
          %s136 = ssub.s32 32, 32
          %137 = vsyncadd %s131, %s136
          %s138 = smul.addr %s22, 2
          %s139 = sadd.s32 %s21, %s138
          %s140 = smul.addr %s139, 32
          %s141 = scalar_lea.hbm %s0, %s140
          %s143 = sshll.u32 %s134, 4
          %s144 = int_to_ptr.vmem [resolvable:$true] %s143
          %146 = dma.hbm_to_vmem [thread:$0]  %s141, 32, %s144, %s131
        $region20: #{tpu_custom_call.1} parent=15 // pred_fallthru
          _
        // Predicated region
        $region21: #{tpu_custom_call.1} parent=15 // pred_check
          %p147 = pneg %p74
        $region22: #{tpu_custom_call.1} parent=15 // pred_check_branch
          %149 = sbr.rel (%p147) target = $region24
        $region23: #{tpu_custom_call.1} parent=15 // pred_region
          %p150 = scmp.lt.s32.totalorder %s21, 1
          %s151 = scalar_select %p150, %s21, 1
          %s152 = scalar_lea.vmem %s1, %s151
        $region24: #{tpu_custom_call.1} parent=15 // pred_fallthru
          _
      $region16: #{tpu_custom_call.1} parent=5 // pred_fallthru
        _
      %p153 = scmp.le.s32.totalorder 1, %s14
      %p154 = scmp.lt.s32.totalorder %s14, 3
      %p155 = pnand %p153, %p154
      %p156 = pneg %p155
      // Predicated region
      $region25: #{tpu_custom_call.1} parent=5 // pred_check
        _
      $region26: #{tpu_custom_call.1} parent=5 // pred_check_branch
        %158 = sbr.rel (%p155) target = $region28
      $region27: #{tpu_custom_call.1} parent=5 // pred_region
        %s159 = ssub.s32 %s14, 1
        %s160 = sand.u32 %s41, 1
        %s161 = scalar_lea.sflag [#allocation3], %s160
        %s162 = sand.u32 %s41, 1
        %s163 = smul.addr %s162, 2
        %s164 = scalar_lea.vmem [#allocation2], %s163
        // Predicated region
        $region29: #{tpu_custom_call.1} parent=27 // pred_check
          %p165 = pneg %p54
        $region30: #{tpu_custom_call.1} parent=27 // pred_check_branch
          %167 = sbr.rel (%p165) target = $region32
        $region31: #{tpu_custom_call.1} parent=27 // pred_region
          %168 = dma.done %s161, 32
        $region32: #{tpu_custom_call.1} parent=27 // pred_fallthru
          _
        %s169 = sand.u32 %s41, 1
        %s170 = scalar_lea.sflag [#allocation3], %s169
        %s171 = sand.u32 %s41, 1
        %s172 = smul.addr %s171, 2
        %s173 = scalar_lea.vmem [#allocation2], %s172
        %p174 = pneg %p54
        %p175 = pneg %p51
        %p176 = scmp.lt.s32.totalorder %s23, 1
        %s177 = scalar_select %p176, %s23, 1
        %s178 = scalar_lea.vmem %s1, %s177
        %p179 = pneg %p80
        %p180 = pneg %p77
        %p181 = pneg %p108
        %p182 = pneg %p105
        %s183 = sand.u32 %s95, 1
        %s184 = scalar_lea.sflag [#allocation4], %s183
        %s185 = sand.u32 %s95, 1
        %s186 = smul.addr %s185, 2
        %s187 = scalar_lea.vmem [#allocation5], %s186
        %p188 = scmp.lt.s32.totalorder %s23, 1
        %s189 = scalar_select %p188, %s23, 1
        %s190 = scalar_lea.vmem %s1, %s189
        %v191 = vld [vmem:[%s164] sm:$0x3]
        %v192 = vld [vmem:[%s190] sm:$0x1]
        %v193 = vmul.f32 %v191, 5.656854
        %v195 = vlaneseq
        %v196 = vshrl.u32 %v195, 7
        %v197 = vsub.s32 0, %v196
        %v198 = vrot.slane %v192, %v197
        %v200 = vadd.f32 %v193, %v198
        %201 = vst [vmem:[%s187] sm:$0x3] %v200
        %s202 = sand.u32 %s95, 1
        %s203 = scalar_lea.sflag [#allocation4], %s202
        %s204 = sand.u32 %s95, 1
        %s205 = smul.addr %s204, 2
        %s206 = scalar_lea.vmem [#allocation5], %s205
        // Predicated region
        $region33: #{tpu_custom_call.1} parent=27 // pred_check
          %p207 = pneg %p105
        $region34: #{tpu_custom_call.1} parent=27 // pred_check_branch
          %209 = sbr.rel (%p207) target = $region36
        $region35: #{tpu_custom_call.1} parent=27 // pred_region
          %s211 = ssub.s32 32, 32
          %212 = vsyncadd %s203, %s211
          %s213 = smul.addr %s24, 2
          %s214 = sadd.s32 %s23, %s213
          %s215 = smul.addr %s214, 32
          %s216 = scalar_lea.hbm %s2, %s215
          %s218 = sshll.u32 %s206, 4
          %s219 = int_to_ptr.vmem [resolvable:$true] %s218
          %221 = dma.vmem_to_hbm [thread:$0]  %s219, 32, %s216, %s203
        $region36: #{tpu_custom_call.1} parent=27 // pred_fallthru
          _
      $region28: #{tpu_custom_call.1} parent=5 // pred_fallthru
        _
      %p222 = scmp.le.s32.totalorder 2, %s14
      // Predicated region
      $region37: #{tpu_custom_call.1} parent=5 // pred_check
        %p223 = pneg %p222
      $region38: #{tpu_custom_call.1} parent=5 // pred_check_branch
        %225 = sbr.rel (%p223) target = $region40
      $region39: #{tpu_custom_call.1} parent=5 // pred_region
        %s226 = ssub.s32 %s14, 2
        // Predicated region
        $region41: #{tpu_custom_call.1} parent=39 // pred_check
          %p227 = pneg %p111
        $region42: #{tpu_custom_call.1} parent=39 // pred_check_branch
          %229 = sbr.rel (%p227) target = $region44
        $region43: #{tpu_custom_call.1} parent=39 // pred_region
          %s230 = sand.u32 %s96, 1
          %s231 = scalar_lea.sflag [#allocation4], %s230
          %s232 = sand.u32 %s96, 1
          %s233 = smul.addr %s232, 2
          %s234 = scalar_lea.vmem [#allocation5], %s233
          %235 = dma.done %s231, 32
        $region44: #{tpu_custom_call.1} parent=39 // pred_fallthru
          _
      $region40: #{tpu_custom_call.1} parent=5 // pred_fallthru
        _
    $region6: #{tpu_custom_call.1} parent=1 // loop_footer
      %s18 = sadd.s32 1, %s14
    $region7: #{tpu_custom_call.1} parent=1 // loop_footer_branch
      %13 = sbr.rel target = $region3
    $region8: #{tpu_custom_call.1} parent=1 // loop_exit
      _
    %236 = vsyncpa [#allocation3], 1
    %s237 = scalar_lea.sflag [#allocation3], 1
    %238 = vsyncpa %s237, 1
    %239 = vsyncpa [#allocation4], 1
    %s240 = scalar_lea.sflag [#allocation4], 1
    %241 = vsyncpa %s240, 1

</llo_original>
